<compile_context>
chip_gen: v7x
topology: tpu7x:2x2x1
jax: 0.10.0
libtpu: 0.0.40
codegen_flags: <defaults>
</compile_context>

<pallas_src>
import functools
import math

import jax
import jax.numpy as jnp
from jax import lax
from jax.experimental import pallas as pl
from jax.experimental.pallas import tpu as pltpu


_BIG = 1e30  # sentinel so masked triplets fall out of the relu as exact zeros


# ---------------------------------------------------------------------------
# 1) Exact TripletLoss.forward(anchor, positive, negative)
# ---------------------------------------------------------------------------
def _single_triplet_kernel(a_ref, p_ref, n_ref, out_ref, *, margin):
    a = a_ref[...].astype(jnp.float32)
    dp = a - p_ref[...].astype(jnp.float32)
    dn = a - n_ref[...].astype(jnp.float32)
    d_pos = jnp.sqrt(jnp.sum(dp * dp))
    d_neg = jnp.sqrt(jnp.sum(dn * dn))
    out_ref[0, 0] = jnp.maximum(d_pos - d_neg + margin, 0.0)


def triplet_loss(anchor, positive, negative, margin=1.0):
    """Forward of the PyTorch TripletLoss module (single triplet) -> scalar."""
    size = anchor.size
    a2 = anchor.reshape(1, size).astype(jnp.float32)
    p2 = positive.reshape(1, size).astype(jnp.float32)
    n2 = negative.reshape(1, size).astype(jnp.float32)
    out = pl.pallas_call(
        functools.partial(_single_triplet_kernel, margin=float(margin)),
        out_shape=jax.ShapeDtypeStruct((1, 1), jnp.float32),
        in_specs=[pl.BlockSpec(memory_space=pltpu.MemorySpace.VMEM)] * 3,
        out_specs=pl.BlockSpec(memory_space=pltpu.MemorySpace.SMEM),
    )(a2, p2, n2)
    return out[0, 0]


# ---------------------------------------------------------------------------
# 2) Batch-all triplet loss, tiled over anchor blocks
# ---------------------------------------------------------------------------
def _batch_all_kernel(emb_ref, sq_row_ref, lab_row_ref, lab_col_ref,
                      out_ref, dpm_scr, dnn_scr,
                      *, margin, n_valid, ta, pos_tile, neg_tile):
    n_pad = emb_ref.shape[0]
    n_pos_tiles = n_pad // pos_tile
    n_neg_tiles = n_pad // neg_tile

    b = pl.program_id(0)
    a_start = pl.multiple_of(b * ta, ta)

    # ---- block setup: distances + masks, O(ta * n_pad), MXU + VPU ----------
    e_a = emb_ref[pl.ds(a_start, ta), :]                       # (TA, D)
    e_all = emb_ref[...]                                       # (Np, D)
    gram = lax.dot_general(e_a, e_all, (((1,), (1,)), ((), ())),
                           preferred_element_type=jnp.float32)  # (TA, Np) MXU
    sq_a = jnp.sum(e_a * e_a, axis=1, keepdims=True)           # (TA, 1)
    d2 = sq_a + sq_row_ref[...] - 2.0 * gram
    d = jnp.sqrt(jnp.maximum(d2, 0.0))                         # (TA, Np)

    lab_a = lab_col_ref[...]                                   # (TA, 1)
    same = lab_a == lab_row_ref[...]                           # (TA, Np)
    a_ids = a_start + lax.broadcasted_iota(jnp.int32, (ta, n_pad), 0)
    c_ids = lax.broadcasted_iota(jnp.int32, (ta, n_pad), 1)
    valid = jnp.logical_and(a_ids < n_valid, c_ids < n_valid)  # mask padding
    pos_mask = same & (c_ids != a_ids) & valid
    neg_mask = (~same) & valid

    # fold mask + margin into the operands so masked triplets relu to 0
    dpm = jnp.where(pos_mask, d + margin, -_BIG)               # (TA, Np)
    dnn = jnp.where(neg_mask, d, _BIG)                         # (TA, Np)

    # Stash into (tile, TA, tile_len) scratch so the hinge loop only ever uses
    # dynamic indices on the major / sublane axes (lane offsets stay static).
    for p in range(n_pos_tiles):
        dpm_scr[p] = dpm[:, p * pos_tile:(p + 1) * pos_tile]
    for t in range(n_neg_tiles):
        dnn_scr[t] = dnn[:, t * neg_tile:(t + 1) * neg_tile]

    # ---- O(ta * n_pad^2) hinge, tiled; vector accumulator ------------------
    # Live temporary per step is (pos_tile, neg_tile) -> independent of N.
    # vacc is (8, neg_tile) f32 (a handful of vregs) carried through the loop;
    # no per-anchor scalar reductions, no cross-lane reduce in the kernel at
    # all (the final reduction happens in plain JAX outside).
    def outer_body(ap, vacc):
        a = ap // n_pos_tiles
        p = ap - a * n_pos_tiles
        # per-anchor positives as a column: tiny lane->sublane relayout (XLU),
        # negligible next to the (pos_tile x neg_tile) VALU hinge it feeds.
        # TODO(synk): if this (1, pos_tile)->(pos_tile, 1) relayout ever shows
        # up in the bundle, switch to transposing 8-anchor groups at once.
        col = jnp.transpose(dpm_scr.at[p][pl.ds(a, 1), :], (1, 0))  # (PT, 1)

        def inner_body(t, vacc):
            row = dnn_scr.at[t][pl.ds(a, 1), :]                 # (1, NT)
            h = jnp.maximum(col - row, 0.0)                     # (PT, NT) VALU
            # fold the pos axis into the (8, NT) accumulator: pure VALU adds
            for s in range(pos_tile // 8):
                vacc = vacc + h[s * 8:(s + 1) * 8, :]
            return vacc

        return lax.fori_loop(0, n_neg_tiles, inner_body, vacc, unroll=2)

    vacc = lax.fori_loop(0, ta * n_pos_tiles, outer_body,
                         jnp.zeros((8, neg_tile), jnp.float32))

    out_ref[...] = vacc        # lane-dense per-block partial (reduced outside)


def batch_all_triplet_loss(embeddings, labels, margin=1.0, block_anchors=128,
                           pos_tile=512, neg_tile=512):
    """embeddings: (N, D) float; labels: (N,) int -> scalar float32 loss.

    block_anchors=128 is a good default; try 256 on v6e/v7x.
    Returns NaN if there are no valid triplets (matches mean-over-valid).
    """
    n, d_dim = embeddings.shape
    e = embeddings.astype(jnp.float32)
    labels = labels.astype(jnp.int32).reshape(-1)

    # ---- tile sizing (all multiples of the (8, 128) vreg tile) -------------
    n128 = max(128, -(-n // 128) * 128)
    ta = min(max(8, (int(block_anchors) + 7) // 8 * 8), n128)
    pos_tile = min(max(8, int(pos_tile) // 8 * 8), n128)
    neg_tile = min(max(128, int(neg_tile) // 128 * 128), n128)
    lcm = ta
    for v in (128, pos_tile, neg_tile):
        lcm = lcm * v // math.gcd(lcm, v)
    n_pad = -(-n // lcm) * lcm
    nb = n_pad // ta
    n_pos_tiles = n_pad // pos_tile
    n_neg_tiles = n_pad // neg_tile

    if n_pad != n:
        e = jnp.pad(e, ((0, n_pad - n), (0, 0)))
        labels_p = jnp.pad(labels, (0, n_pad - n), constant_values=-1)
    else:
        labels_p = labels

    # wrapper-side layout plumbing: one lane-dense row view of ||e||^2 and the
    # labels, plus a sublane (column) view of labels for the anchor blocks
    sq = jnp.sum(e * e, axis=-1)
    sq_row = sq.reshape(1, n_pad)
    lab_row = labels_p.reshape(1, n_pad)
    lab_col = labels_p.reshape(n_pad, 1)

    # analytic triplet count from labels (no O(N^3) tensor, not accumulated in
    # the kernel). f32 products of exact small ints; fine up to huge batches.
    same_cnt = jnp.sum((labels[:, None] == labels[None, :]).astype(jnp.float32),
                       axis=1)
    pos_cnt = same_cnt - 1.0
    neg_cnt = jnp.float32(n) - same_cnt
    count = jnp.sum(pos_cnt * neg_cnt)

    # ---- VMEM budget: tiled working set, capped below physical VMEM --------
    est_bytes = 4 * (2 * n_pad * d_dim          # resident embeddings (<=2 bufs)
                     + 8 * ta * n_pad           # dpm/dnn scratch + setup temps
                     + 4 * pos_tile * neg_tile  # hinge temporaries
                     + 8 * n_pad)               # row/col vectors
    try:
        phys = int(pltpu.get_tpu_info().vmem_capacity_bytes)
    except Exception:
        phys = 128 * 1024 * 1024
    vmem_limit = int(min(max(est_bytes + (4 << 20), 32 * 1024 * 1024),
                         (phys * 3) // 4))

    kernel = functools.partial(
        _batch_all_kernel, margin=float(margin), n_valid=int(n),
        ta=ta, pos_tile=pos_tile, neg_tile=neg_tile)

    def _build(single_buffer_residents):
        def resident(shape):
            if single_buffer_residents:
                # constant-index resident block: no need to double-buffer
                return pl.BlockSpec(shape, lambda b: (0, 0),
                                    pipeline_mode=pl.Buffered(1))
            return pl.BlockSpec(shape, lambda b: (0, 0))

        grid_spec = pltpu.PrefetchScalarGridSpec(
            num_scalar_prefetch=0,
            grid=(nb,),
            in_specs=[
                resident((n_pad, d_dim)),                 # embeddings (resident)
                resident((1, n_pad)),                     # ||e||^2 row (resident)
                resident((1, n_pad)),                     # labels row (resident)
                pl.BlockSpec((ta, 1), lambda b: (b, 0)),  # anchor labels column
            ],
            out_specs=pl.BlockSpec((8, neg_tile), lambda b: (b, 0)),
            scratch_shapes=[
                pltpu.VMEM((n_pos_tiles, ta, pos_tile), jnp.float32),
                pltpu.VMEM((n_neg_tiles, ta, neg_tile), jnp.float32),
            ])
        return pl.pallas_call(
            kernel,
            out_shape=jax.ShapeDtypeStruct((nb * 8, neg_tile), jnp.float32),
            grid_spec=grid_spec,
            compiler_params=pltpu.CompilerParams(
                dimension_semantics=("parallel",),  # independent per-block partials
                vmem_limit_bytes=vmem_limit,
            ))

    try:
        partials = _build(True)(e, sq_row, lab_row, lab_col)
    except Exception:
        # pl.Buffered(1) single-buffering unsupported on this jax/libtpu ->
        # fall back to default double buffering (correctness identical).
        partials = _build(False)(e, sq_row, lab_row, lab_col)

    total = jnp.sum(partials)
    return total / count


# ---------------------------------------------------------------------------
# Pure-JAX references (sanity checks)
# ---------------------------------------------------------------------------
def _reference_single(anchor, positive, negative, margin=1.0):
    dp = jnp.sqrt(jnp.sum((anchor - positive) ** 2))
    dn = jnp.sqrt(jnp.sum((anchor - negative) ** 2))
    return jnp.maximum(dp - dn + margin, 0.0)


def _reference_batch_all(embeddings, labels, margin=1.0):
    e = embeddings.astype(jnp.float32)
    sq = jnp.sum(e * e, -1)
    d = jnp.sqrt(jnp.maximum(sq[:, None] + sq[None, :] - 2.0 * e @ e.T, 0.0))
    same = labels[:, None] == labels[None, :]
    eye = jnp.eye(labels.shape[0], dtype=bool)
    pos = same & ~eye
    neg = ~same
    tri = jnp.maximum(d[:, :, None] - d[:, None, :] + margin, 0.0)
    m = (pos[:, :, None] & neg[:, None, :]).astype(jnp.float32)
    return jnp.sum(tri * m) / jnp.sum(m)


if __name__ == "__main__":
    key = jax.random.PRNGKey(0)
    k1, k2, k3, k4 = jax.random.split(key, 4)

    # --- single-triplet TripletLoss (the reference module's forward) --------
    D = 32
    anchor = jax.random.normal(k1, (1, D), dtype=jnp.float32)
    positive = anchor + 0.1 * jax.random.normal(k2, (1, D), dtype=jnp.float32)
    negative = jax.random.normal(k3, (1, D), dtype=jnp.float32)

    loss1 = jax.block_until_ready(triplet_loss(anchor, positive, negative, margin=1.0))
    ref1 = _reference_single(anchor, positive, negative, margin=1.0)
    assert jnp.allclose(loss1, ref1, rtol=1e-5, atol=1e-5), (loss1, ref1)

    # --- batched (batch-all) extension ---------------------------------------
    N = 16
    embeddings = jax.random.normal(k4, (N, D), dtype=jnp.float32)
    labels = jnp.arange(N, dtype=jnp.int32) % 4     # 4 classes, 4 members each

    loss2 = jax.block_until_ready(
        batch_all_triplet_loss(embeddings, labels, margin=1.0))
    ref2 = _reference_batch_all(embeddings, labels, margin=1.0)
    assert jnp.allclose(loss2, ref2, rtol=1e-5, atol=1e-4), (loss2, ref2)

    print("KERNEL_OK")
</pallas_src>

<mosaic_0001>
module attributes {stable_mosaic.version = 11 : i64} {
  func.func @_single_triplet_kernel(%arg0: memref<1x32xf32, #tpu.memory_space<vmem>>, %arg1: memref<1x32xf32, #tpu.memory_space<vmem>>, %arg2: memref<1x32xf32, #tpu.memory_space<vmem>>, %arg3: memref<1x1xf32, #tpu.memory_space<smem>>) attributes {dimension_semantics = [], scalar_prefetch = 0 : i64, scratch_operands = 0 : i64, tpu.core_type = #tpu.core_type<tc>} {
    %c0 = arith.constant 0 : index
    %c0_0 = arith.constant 0 : index
    %0 = vector.load %arg0[%c0, %c0_0] : memref<1x32xf32, #tpu.memory_space<vmem>>, vector<1x32xf32>
    %c0_1 = arith.constant 0 : index
    %c0_2 = arith.constant 0 : index
    %1 = vector.load %arg1[%c0_1, %c0_2] : memref<1x32xf32, #tpu.memory_space<vmem>>, vector<1x32xf32>
    %2 = arith.subf %0, %1 : vector<1x32xf32>
    %c0_3 = arith.constant 0 : index
    %c0_4 = arith.constant 0 : index
    %3 = vector.load %arg2[%c0_3, %c0_4] : memref<1x32xf32, #tpu.memory_space<vmem>>, vector<1x32xf32>
    %4 = arith.subf %0, %3 : vector<1x32xf32>
    %5 = arith.mulf %2, %2 : vector<1x32xf32>
    %6 = vector.shape_cast %5 : vector<1x32xf32> to vector<1x1x32xf32>
    %cst = arith.constant dense<0.000000e+00> : vector<1xf32>
    %7 = vector.multi_reduction <add>, %6, %cst [1, 2] : vector<1x1x32xf32> to vector<1xf32>
    %8 = vector.shape_cast %7 : vector<1xf32> to vector<1x1x1xf32>
    %9 = vector.extract %8[0, 0, 0] : f32 from vector<1x1x1xf32>
    %10 = math.sqrt %9 : f32
    %11 = arith.mulf %4, %4 : vector<1x32xf32>
    %12 = vector.shape_cast %11 : vector<1x32xf32> to vector<1x1x32xf32>
    %cst_5 = arith.constant dense<0.000000e+00> : vector<1xf32>
    %13 = vector.multi_reduction <add>, %12, %cst_5 [1, 2] : vector<1x1x32xf32> to vector<1xf32>
    %14 = vector.shape_cast %13 : vector<1xf32> to vector<1x1x1xf32>
    %15 = vector.extract %14[0, 0, 0] : f32 from vector<1x1x1xf32>
    %16 = math.sqrt %15 : f32
    %17 = arith.subf %10, %16 : f32
    %cst_6 = arith.constant 1.000000e+00 : f32
    %18 = arith.addf %17, %cst_6 : f32
    %cst_7 = arith.constant 0.000000e+00 : f32
    %19 = arith.maximumf %18, %cst_7 : f32
    %c0_8 = arith.constant 0 : index
    %c0_9 = arith.constant 0 : index
    %20 = memref.load %arg3[%c0_8, %c0_9] : memref<1x1xf32, #tpu.memory_space<smem>>
    memref.store %19, %arg3[%c0_8, %c0_9] : memref<1x1xf32, #tpu.memory_space<smem>>
    return
  }
}

</mosaic_0001>

<llo_original>
// kernel: tpu_custom_call.1
$region0: #{tpu_custom_call.1}
  #allocation0 [shape = 'u32[]', space=smem, size = 0x4, offset = 0x4, fixed_abs, tag = 'smem constant byte address 0x4 - core index']
  #allocation1 [shape = 'u32[144,128]{1,0:T(1,128)}', space=vmem, size = 0x12000, scoped, tag = 'internal scratch']
  %s0 = inlined_call_operand.hbm [shape: f32[1,32], index: 0, kind: input, shape index: {}]
  %s1 = inlined_call_operand.vmem [shape: f32[1,32], index: 1, kind: input, shape index: {}]
  %s2 = inlined_call_operand.vmem [shape: f32[1,32], index: 2, kind: input, shape index: {}]
  %s3 = inlined_call_operand.hbm [shape: f32[1,1], index: 3, kind: output, shape index: {}]
  %s4 = sld [smem:[#allocation0]]
  $region26: #{tpu_custom_call.1} parent=0
    _
  %s6 = ssub.s32 1, %s4
  %s7 = scalar_select 0, %s6, %s4
  $region1: #{tpu_custom_call.1} parent=0
    #allocation2 [shape = 'u8[512]{0}', space=vmem, size = 0x400, scoped, tag = 'input window, operand 0, single buffered']
    #allocation3 [shape = 's32[1]{0}', space=sflag, size = 0x4, scoped, tag = 'scoped memory for tpu_custom_call.1']
    #allocation4 [shape = 's32[1]{0}', space=sflag, size = 0x4, scoped, tag = 'scoped memory for tpu_custom_call.1']
    #allocation5 [shape = 'u8[512]{0}', space=smem, size = 0x200, scoped, tag = 'output window, operand 0, single buffered']
    %8 = vsyncpa [#allocation3], 0
    %9 = vsyncpa [#allocation4], 0
    // Predicated region
    $region2: #{tpu_custom_call.1} parent=1 // pred_check
      _
    $region3: #{tpu_custom_call.1} parent=1 // pred_check_branch
      %11 = sbr.rel (0) target = $region5
    $region4: #{tpu_custom_call.1} parent=1 // pred_region
      %s13 = ssub.s32 16, 16
      %14 = vsyncadd [#allocation3], %s13
      %s16 = sshll.u32 [#allocation2], 4
      %s17 = int_to_ptr.vmem [resolvable:$true] %s16
      %19 = dma.hbm_to_vmem [thread:$0]  %s0, 16, %s17, [#allocation3]
    $region5: #{tpu_custom_call.1} parent=1 // pred_fallthru
      _
    // Predicated region
    $region6: #{tpu_custom_call.1} parent=1 // pred_check
      _
    $region7: #{tpu_custom_call.1} parent=1 // pred_check_branch
      %21 = sbr.rel (0) target = $region9
    $region8: #{tpu_custom_call.1} parent=1 // pred_region
      _
    $region9: #{tpu_custom_call.1} parent=1 // pred_fallthru
      _
    // Predicated region
    $region10: #{tpu_custom_call.1} parent=1 // pred_check
      _
    $region11: #{tpu_custom_call.1} parent=1 // pred_check_branch
      %23 = sbr.rel (0) target = $region13
    $region12: #{tpu_custom_call.1} parent=1 // pred_region
      _
    $region13: #{tpu_custom_call.1} parent=1 // pred_fallthru
      _
    // Predicated region
    $region14: #{tpu_custom_call.1} parent=1 // pred_check
      _
    $region15: #{tpu_custom_call.1} parent=1 // pred_check_branch
      %25 = sbr.rel (0) target = $region17
    $region16: #{tpu_custom_call.1} parent=1 // pred_region
      %26 = dma.done [#allocation3], 16
    $region17: #{tpu_custom_call.1} parent=1 // pred_fallthru
      _
    %v27 = vld [vmem:[#allocation2] sm:$0x1]
    %v28 = vld [vmem:[%s1] sm:$0x1]
    %v29 = vsub.f32 %v27, %v28
    %v30 = vld [vmem:[%s2] sm:$0x1]
    %v31 = vsub.f32 %v27, %v30
    %v32 = vmul.f32 %v29, %v29
    %vm33 = vcmask 253952
    %v34 = vsel %vm33, %v32, 0.0
    %35 = vadd.xlane.f32.xlu0 %v34
    %v36 = vpop.xlane.xlu0 %35
    %v37 = vrot.slane %v36, 4
    %v38 = vadd.f32 %v36, %v37
    %v39 = vrot.slane %v38, 2
    %v40 = vadd.f32 %v38, %v39
    %v41 = vrot.slane %v40, 1
    %v42 = vadd.f32 %v40, %v41
    %s43 = vtos %v42
    %v44 = vstv %s43
    %v45 = vrsqrt.pop %v44
    %v46 = vmul.f32 %v44, %v45
    %vm47 = vcmp.eq.f32.partialorder %v44, inf
    %v48 = vsel %vm47, %v44, %v46
    %vm49 = vcmp.eq.f32.partialorder %v44, 0.0
    %v50 = vand.u32 %v44, 2147483648
    %v51 = vsel %vm49, %v50, %v48
    %s52 = vtos %v51
    %v53 = vmul.f32 %v31, %v31
    %v54 = vsel %vm33, %v53, 0.0
    %55 = vadd.xlane.f32.xlu0 %v54
    %v56 = vpop.xlane.xlu0 %55
    %v57 = vrot.slane %v56, 4
    %v58 = vadd.f32 %v56, %v57
    %v59 = vrot.slane %v58, 2
    %v60 = vadd.f32 %v58, %v59
    %v61 = vrot.slane %v60, 1
    %v62 = vadd.f32 %v60, %v61
    %s63 = vtos %v62
    %v64 = vstv %s63
    %v65 = vrsqrt.pop %v64
    %v66 = vmul.f32 %v64, %v65
    %vm67 = vcmp.eq.f32.partialorder %v64, inf
    %v68 = vsel %vm67, %v64, %v66
    %vm69 = vcmp.eq.f32.partialorder %v64, 0.0
    %v70 = vand.u32 %v64, 2147483648
    %v71 = vsel %vm69, %v70, %v68
    %s72 = vtos %v71
    %s73 = ssub.f32 %s52, %s72
    %s74 = sadd.f32 %s73, 1.0
    %s75 = smax.f32 %s74, 0.0
    %s76 = scalar_lea.smem [#allocation5], 0
    %77 = sst [smem:[%s76]] %s75
    // Predicated region
    $region18: #{tpu_custom_call.1} parent=1 // pred_check
      _
    $region19: #{tpu_custom_call.1} parent=1 // pred_check_branch
      %79 = sbr.rel (0) target = $region21
    $region20: #{tpu_custom_call.1} parent=1 // pred_region
      %s81 = ssub.s32 16, 16
      %82 = vsyncadd [#allocation4], %s81
      %85 = dma.smem_to_hbm [#allocation5], 16, %s3, [#allocation4]
    $region21: #{tpu_custom_call.1} parent=1 // pred_fallthru
      _
    // Predicated region
    $region22: #{tpu_custom_call.1} parent=1 // pred_check
      _
    $region23: #{tpu_custom_call.1} parent=1 // pred_check_branch
      %87 = sbr.rel (0) target = $region25
    $region24: #{tpu_custom_call.1} parent=1 // pred_region
      %88 = dma.done [#allocation4], 16
    $region25: #{tpu_custom_call.1} parent=1 // pred_fallthru
      _
    %89 = sfence
    %90 = vsyncpa [#allocation3], 1
    %91 = vsyncpa [#allocation4], 1

</llo_original>
